<compile_context>
chip_gen: v6e
topology: v6e:2x2x1
jax: 0.10.0
libtpu: 0.0.40
codegen_flags: <defaults>
</compile_context>

<pallas_src>
import jax
import jax.numpy as jnp
from jax import lax
from jax.experimental import pallas as pl
from jax.experimental.pallas import tpu as pltpu

LANE = 128            # vreg lane width — last dim of every tile
MAX_TILE_ROWS = 1024  # 1024*128*4B = 512 KiB/buffer; x2 inputs x2 double-buffers
                      # = 2 MiB in flight -> safe on v5e/v6e (128 MiB) and v7x (64 MiB)


# ----------------------------------------------------------------------------
# Shared tiled masked-mean reduction kernel
# ----------------------------------------------------------------------------
def _make_mean_kernel(elem_fn, tile_rows, total):
    """Kernel computing mean(elem_fn(a, b)) over the first `total` flat elements."""
    inv_total = 1.0 / float(total)

    def kernel(a_ref, b_ref, out_ref):
        i = pl.program_id(0)

        @pl.when(i == 0)
        def _():
            out_ref[...] = jnp.zeros_like(out_ref)

        # Load in native dtype (bf16 inputs DMA at half the bytes), upcast in-vreg.
        a = a_ref[...].astype(jnp.float32)
        b = b_ref[...].astype(jnp.float32)
        per = elem_fn(a, b)                                   # (tile_rows, LANE) f32

        # Mask out padded elements of the last (partial) tile.
        row = lax.broadcasted_iota(jnp.int32, per.shape, 0)
        lane = lax.broadcasted_iota(jnp.int32, per.shape, 1)
        gidx = (i * tile_rows + row) * LANE + lane
        per = jnp.where(gidx < total, per, 0.0)

        out_ref[...] += jnp.sum(per).reshape(1, 1)

        @pl.when(i == pl.num_programs(0) - 1)
        def _():
            out_ref[...] = out_ref[...] * inv_total

    return kernel


def _tiled_mean(elem_fn, a, b, *, transcendentals_per_elem=0, extra_flops_per_elem=4):
    """mean(elem_fn(a, b)) over all elements, as a tiled Pallas reduction."""
    assert a.shape == b.shape, (a.shape, b.shape)
    total = int(a.size)
    rows = (total + LANE - 1) // LANE
    # Tile rows: multiple of 8 (sublane), capped so 2 inputs x 2 buffers fit easily
    # in scoped VMEM on every generation (incl. v7x's 64 MiB).
    tile_rows = min(MAX_TILE_ROWS, max(8, ((rows + 7) // 8) * 8))
    num_tiles = (rows + tile_rows - 1) // tile_rows
    padded_rows = num_tiles * tile_rows
    padded = padded_rows * LANE

    a_flat = a.reshape(-1)
    b_flat = b.reshape(-1)
    if padded != total:
        pad = padded - total
        a_flat = jnp.concatenate([a_flat, jnp.zeros((pad,), a_flat.dtype)])
        b_flat = jnp.concatenate([b_flat, jnp.zeros((pad,), b_flat.dtype)])
    a2 = a_flat.reshape(padded_rows, LANE)
    b2 = b_flat.reshape(padded_rows, LANE)

    itemsize = jnp.dtype(a.dtype).itemsize
    cost = pl.CostEstimate(
        flops=(extra_flops_per_elem + 2) * total,
        transcendentals=transcendentals_per_elem * total,
        bytes_accessed=2 * total * itemsize + 4,
    )

    kernel = _make_mean_kernel(elem_fn, tile_rows, total)
    out = pl.pallas_call(
        kernel,
        out_shape=jax.ShapeDtypeStruct((1, 1), jnp.float32),
        grid=(num_tiles,),
        in_specs=[
            pl.BlockSpec((tile_rows, LANE), lambda i: (i, 0)),
            pl.BlockSpec((tile_rows, LANE), lambda i: (i, 0)),
        ],
        out_specs=pl.BlockSpec((1, 1), lambda i: (0, 0)),
        compiler_params=pltpu.CompilerParams(
            # Running-sum accumulator -> reduction axis must be "arbitrary".
            # (A leading "parallel" split across v7x's 2 TCs with per-core
            #  partial sums is a further option for very large inputs.)
            dimension_semantics=("arbitrary",),
            vmem_limit_bytes=32 * 1024 * 1024,
        ),
        cost_estimate=cost,
    )(a2, b2)
    return out[0, 0]


# ----------------------------------------------------------------------------
# Elementwise loss bodies
# ----------------------------------------------------------------------------
def _bce_elem(o, t):
    # nn.BCELoss: -(t*log(o) + (1-t)*log(1-o)), with log terms clamped at -100.
    log_o = jnp.maximum(jnp.log(o), -100.0)
    log_1mo = jnp.maximum(jnp.log(1.0 - o), -100.0)
    return -(t * log_o + (1.0 - t) * log_1mo)


def _euclid_elem(o, t):
    # sqrt((o - t)**2) == |o - t|
    return jnp.abs(o - t)


def bce_loss(output, target):
    """nn.BCELoss() (mean reduction) on probabilities `output` and targets `target`."""
    return _tiled_mean(_bce_elem, output, target,
                       transcendentals_per_elem=2, extra_flops_per_elem=6)


def euclidean_loss(output, target, reduction="mean"):
    """EuclideanLoss: mean (or sum) of sqrt((output - target)**2)."""
    mean = _tiled_mean(_euclid_elem, output, target,
                       transcendentals_per_elem=0, extra_flops_per_elem=2)
    if reduction == "sum":
        return mean * float(int(output.size))
    return mean


# ----------------------------------------------------------------------------
# ACNNLoss wrapper (forward semantics of the PyTorch module)
# ----------------------------------------------------------------------------
class ACNNLoss:
    def __init__(self, encoder_fn=None, lambda_1=0.01, sigma=0.01,
                 training=True, verbose=False):
        # TODO(synk): torch.load(aeModelPath)['state_dict'] and the external
        # autoencoder's .module.encoder have no self-contained Pallas equivalent;
        # the pretrained encoder is injected here as `encoder_fn`.
        self.training = training
        self.encoder_fn = encoder_fn
        self.lambda_1 = lambda_1          # kept for parity (unused in forward, as in the original)
        self.sigma = sigma
        self.verbose = verbose            # original module always prints the loss line

    def __call__(self, output, target, epoch):
        losses = [bce_loss(output, target)]
        if self.training and self.encoder_fn is not None:
            ae_output_codes = self.encoder_fn(output)
            ae_target_codes = self.encoder_fn(target)
            scale = 1.0 - (1.0 - max(0.01, (epoch - 1) * self.sigma))
            losses.append(scale * euclidean_loss(ae_output_codes, ae_target_codes))
        if self.verbose:
            print("Loss: " + "+".join("{:.6f}".format(float(l)) for l in losses))
        return sum(losses)


# ----------------------------------------------------------------------------
if __name__ == "__main__":
    key = jax.random.PRNGKey(0)
    k_out, k_tgt, k_enc = jax.random.split(key, 3)

    B, C, H, W = 2, 1, 16, 16
    # probabilities in (0,1) and binary targets, as expected by nn.BCELoss
    output = jax.nn.sigmoid(jax.random.normal(k_out, (B, C, H, W), dtype=jnp.float32))
    target = (jax.random.uniform(k_tgt, (B, C, H, W)) > 0.5).astype(jnp.float32)

    # Deterministic placeholder for the pretrained autoencoder encoder.
    code_dim = 32
    w_enc = jax.random.normal(k_enc, (C * H * W, code_dim), dtype=jnp.float32) * 0.05
    encoder_fn = lambda x: jnp.dot(x.reshape(x.shape[0], -1), w_enc)

    loss_mod = ACNNLoss(encoder_fn=encoder_fn, lambda_1=0.01, sigma=0.01, training=True)
    epoch = 3
    loss = loss_mod(output, target, epoch)
    loss = jax.block_until_ready(loss)

    # Pure-JAX reference
    ref_bce = -jnp.mean(target * jnp.maximum(jnp.log(output), -100.0)
                        + (1.0 - target) * jnp.maximum(jnp.log(1.0 - output), -100.0))
    co, ct = encoder_fn(output), encoder_fn(target)
    ref_euc = jnp.mean(jnp.abs(co - ct))
    scale = 1.0 - (1.0 - max(0.01, (epoch - 1) * 0.01))
    ref = ref_bce + scale * ref_euc

    assert jnp.allclose(loss, ref, atol=1e-5, rtol=1e-5), (float(loss), float(ref))
    print("KERNEL_OK")
</pallas_src>

<mosaic_0001>
module attributes {stable_mosaic.version = 11 : i64} {
  func.func @kernel(%arg0: i32, %arg1: memref<8x128xf32, #tpu.memory_space<vmem>>, %arg2: memref<8x128xf32, #tpu.memory_space<vmem>>, %arg3: memref<1x1xf32, #tpu.memory_space<vmem>>) attributes {dimension_semantics = [#tpu.dimension_semantics<arbitrary>], iteration_bounds = array<i64: 1>, scalar_prefetch = 0 : i64, scratch_operands = 0 : i64, tpu.core_type = #tpu.core_type<tc>, window_params = [{transform_indices = @transform_0, window_bounds = array<i64: 8, 128>}, {transform_indices = @transform_1, window_bounds = array<i64: 8, 128>}, {pipeline_mode = #tpu.pipeline_mode<synchronous>, transform_indices = @transform_2, window_bounds = array<i64: 1, 1>}]} {
    %c0_i32 = arith.constant 0 : i32
    %0 = arith.cmpi eq, %arg0, %c0_i32 : i32
    %1 = arith.extui %0 : i1 to i32
    %c0_i32_0 = arith.constant 0 : i32
    %2 = arith.cmpi ne, %1, %c0_i32_0 : i32
    scf.if %2 {
      %cst_16 = arith.constant 0.000000e+00 : f32
      %43 = vector.broadcast %cst_16 : f32 to vector<1x1xf32>
      %c0_17 = arith.constant 0 : index
      %c0_18 = arith.constant 0 : index
      %44 = vector.load %arg3[%c0_17, %c0_18] : memref<1x1xf32, #tpu.memory_space<vmem>>, vector<1x1xf32>
      tpu.vector_store %arg3[%c0_17, %c0_18], %43 {strides = array<i32>} : memref<1x1xf32, #tpu.memory_space<vmem>>, vector<1x1xf32>,
    } else {
    }
    %c0 = arith.constant 0 : index
    %c0_1 = arith.constant 0 : index
    %3 = vector.load %arg1[%c0, %c0_1] : memref<8x128xf32, #tpu.memory_space<vmem>>, vector<8x128xf32>
    %c0_2 = arith.constant 0 : index
    %c0_3 = arith.constant 0 : index
    %4 = vector.load %arg2[%c0_2, %c0_3] : memref<8x128xf32, #tpu.memory_space<vmem>>, vector<8x128xf32>
    %5 = math.log %3 : vector<8x128xf32>
    %cst = arith.constant -1.000000e+02 : f32
    %6 = vector.broadcast %cst : f32 to vector<8x128xf32>
    %7 = arith.maximumf %5, %6 : vector<8x128xf32>
    %cst_4 = arith.constant 1.000000e+00 : f32
    %8 = vector.broadcast %cst_4 : f32 to vector<8x128xf32>
    %9 = arith.subf %8, %3 : vector<8x128xf32>
    %10 = math.log %9 : vector<8x128xf32>
    %cst_5 = arith.constant -1.000000e+02 : f32
    %11 = vector.broadcast %cst_5 : f32 to vector<8x128xf32>
    %12 = arith.maximumf %10, %11 : vector<8x128xf32>
    %13 = arith.mulf %4, %7 : vector<8x128xf32>
    %cst_6 = arith.constant 1.000000e+00 : f32
    %14 = vector.broadcast %cst_6 : f32 to vector<8x128xf32>
    %15 = arith.subf %14, %4 : vector<8x128xf32>
    %16 = arith.mulf %15, %12 : vector<8x128xf32>
    %17 = arith.addf %13, %16 : vector<8x128xf32>
    %cst_7 = arith.constant 0.000000e+00 : f32
    %18 = vector.broadcast %cst_7 : f32 to vector<8x128xf32>
    %19 = arith.subf %18, %17 : vector<8x128xf32>
    %20 = tpu.iota {dimensions = array<i32: 0>} : vector<8x128xi32>
    %21 = tpu.iota {dimensions = array<i32: 1>} : vector<8x128xi32>
    %c8_i32 = arith.constant 8 : i32
    %22 = arith.muli %arg0, %c8_i32 : i32
    %23 = vector.broadcast %22 : i32 to vector<8x128xi32>
    %24 = arith.addi %23, %20 : vector<8x128xi32>
    %c128_i32 = arith.constant 128 : i32
    %25 = vector.broadcast %c128_i32 : i32 to vector<8x128xi32>
    %26 = arith.muli %24, %25 : vector<8x128xi32>
    %27 = arith.addi %26, %21 : vector<8x128xi32>
    %c512_i32 = arith.constant 512 : i32
    %28 = vector.broadcast %c512_i32 : i32 to vector<8x128xi32>
    %29 = arith.cmpi slt, %27, %28 : vector<8x128xi32>
    %cst_8 = arith.constant 0.000000e+00 : f32
    %30 = vector.broadcast %cst_8 : f32 to vector<8x128xf32>
    %31 = arith.select %29, %19, %30 : vector<8x128xi1>, vector<8x128xf32>
    %c0_9 = arith.constant 0 : index
    %c0_10 = arith.constant 0 : index
    %32 = vector.load %arg3[%c0_9, %c0_10] : memref<1x1xf32, #tpu.memory_space<vmem>>, vector<1x1xf32>
    %33 = vector.shape_cast %31 : vector<8x128xf32> to vector<1x8x128xf32>
    %cst_11 = arith.constant dense<0.000000e+00> : vector<1xf32>
    %34 = vector.multi_reduction <add>, %33, %cst_11 [1, 2] : vector<1x8x128xf32> to vector<1xf32>
    %35 = vector.shape_cast %34 : vector<1xf32> to vector<1x1x1xf32>
    %36 = vector.extract %35[0, 0, 0] : f32 from vector<1x1x1xf32>
    %37 = vector.broadcast %36 : f32 to vector<1x1xf32>
    %38 = arith.addf %32, %37 : vector<1x1xf32>
    %c0_12 = arith.constant 0 : index
    %c0_13 = arith.constant 0 : index
    %39 = vector.load %arg3[%c0_12, %c0_13] : memref<1x1xf32, #tpu.memory_space<vmem>>, vector<1x1xf32>
    tpu.vector_store %arg3[%c0_12, %c0_13], %38 {strides = array<i32>} : memref<1x1xf32, #tpu.memory_space<vmem>>, vector<1x1xf32>,
    %c0_i32_14 = arith.constant 0 : i32
    %40 = arith.cmpi eq, %arg0, %c0_i32_14 : i32
    %41 = arith.extui %40 : i1 to i32
    %c0_i32_15 = arith.constant 0 : i32
    %42 = arith.cmpi ne, %41, %c0_i32_15 : i32
    scf.if %42 {
      %c0_16 = arith.constant 0 : index
      %c0_17 = arith.constant 0 : index
      %43 = vector.load %arg3[%c0_16, %c0_17] : memref<1x1xf32, #tpu.memory_space<vmem>>, vector<1x1xf32>
      %cst_18 = arith.constant 0.001953125 : f32
      %44 = vector.broadcast %cst_18 : f32 to vector<1x1xf32>
      %45 = arith.mulf %43, %44 : vector<1x1xf32>
      %c0_19 = arith.constant 0 : index
      %c0_20 = arith.constant 0 : index
      %46 = vector.load %arg3[%c0_19, %c0_20] : memref<1x1xf32, #tpu.memory_space<vmem>>, vector<1x1xf32>
      tpu.vector_store %arg3[%c0_19, %c0_20], %45 {strides = array<i32>} : memref<1x1xf32, #tpu.memory_space<vmem>>, vector<1x1xf32>,
    } else {
    }
    return
  }
  func.func @transform_0(%arg0: i32) -> (i32, i32) {
    %c0_i32 = arith.constant 0 : i32
    %c0_i32_0 = arith.constant 0 : i32
    return %arg0, %c0_i32 : i32, i32
  }
  func.func @transform_1(%arg0: i32) -> (i32, i32) {
    %c0_i32 = arith.constant 0 : i32
    %c0_i32_0 = arith.constant 0 : i32
    return %arg0, %c0_i32 : i32, i32
  }
  func.func @transform_2(%arg0: i32) -> (i32, i32) {
    %c0_i32 = arith.constant 0 : i32
    %c0_i32_0 = arith.constant 0 : i32
    %c0_i32_1 = arith.constant 0 : i32
    return %c0_i32, %c0_i32_0 : i32, i32
  }
}

</mosaic_0001>

<llo_original>
// kernel: tpu_custom_call.1
$region0: #{tpu_custom_call.1}
  #allocation0 [shape = 'u32[]', space=smem, size = 0x4, offset = 0x4, fixed_abs, tag = 'smem constant byte address 0x4 - core index']
  #allocation1 [shape = 'u32[144,128]{1,0:T(1,128)}', space=vmem, size = 0x12000, scoped, tag = 'internal scratch']
  %s0 = inlined_call_operand.hbm [shape: f32[8,128], index: 0, kind: input, shape index: {}]
  %s1 = inlined_call_operand.hbm [shape: f32[8,128], index: 1, kind: input, shape index: {}]
  %s2 = inlined_call_operand.hbm [shape: f32[1,1], index: 2, kind: output, shape index: {}]
  %s3 = sld [smem:[#allocation0]]
  $region34: #{tpu_custom_call.1} parent=0
    _
  %s5 = ssub.s32 1, %s3
  %s6 = scalar_select 0, %s5, %s3
  $region1: #{tpu_custom_call.1} parent=0
    #allocation2 [shape = 'u8[4096]{0}', space=vmem, size = 0x1000, scoped, tag = 'input window, operand 0, single buffered']
    #allocation3 [shape = 's32[1]{0}', space=sflag, size = 0x4, scoped, tag = 'scoped memory for tpu_custom_call.1']
    #allocation4 [shape = 's32[1]{0}', space=sflag, size = 0x4, scoped, tag = 'scoped memory for tpu_custom_call.1']
    #allocation5 [shape = 'u8[4096]{0}', space=vmem, size = 0x1000, scoped, tag = 'input window, operand 1, single buffered']
    #allocation6 [shape = 's32[1]{0}', space=sflag, size = 0x4, scoped, tag = 'scoped memory for tpu_custom_call.1']
    #allocation7 [shape = 'u8[512]{0}', space=vmem, size = 0x400, scoped, tag = 'output window, operand 0, single buffered']
    %7 = vsyncpa [#allocation3], 0
    %8 = vsyncpa [#allocation6], 0
    %9 = vsyncpa [#allocation4], 0
    // Predicated region
    $region2: #{tpu_custom_call.1} parent=1 // pred_check
      _
    $region3: #{tpu_custom_call.1} parent=1 // pred_check_branch
      %11 = sbr.rel (0) target = $region5
    $region4: #{tpu_custom_call.1} parent=1 // pred_region
      %s13 = ssub.s32 128, 128
      %14 = vsyncadd [#allocation3], %s13
      %s16 = sshll.u32 [#allocation2], 4
      %s17 = int_to_ptr.vmem [resolvable:$true] %s16
      %19 = dma.hbm_to_vmem [thread:$0]  %s0, 128, %s17, [#allocation3]
    $region5: #{tpu_custom_call.1} parent=1 // pred_fallthru
      _
    // Predicated region
    $region6: #{tpu_custom_call.1} parent=1 // pred_check
      _
    $region7: #{tpu_custom_call.1} parent=1 // pred_check_branch
      %21 = sbr.rel (0) target = $region9
    $region8: #{tpu_custom_call.1} parent=1 // pred_region
      %s23 = ssub.s32 128, 128
      %24 = vsyncadd [#allocation6], %s23
      %s26 = sshll.u32 [#allocation5], 4
      %s27 = int_to_ptr.vmem [resolvable:$true] %s26
      %29 = dma.hbm_to_vmem [thread:$0]  %s1, 128, %s27, [#allocation6]
    $region9: #{tpu_custom_call.1} parent=1 // pred_fallthru
      _
    // Predicated region
    $region10: #{tpu_custom_call.1} parent=1 // pred_check
      _
    $region11: #{tpu_custom_call.1} parent=1 // pred_check_branch
      %31 = sbr.rel (0) target = $region13
    $region12: #{tpu_custom_call.1} parent=1 // pred_region
      %32 = dma.done [#allocation3], 128
    $region13: #{tpu_custom_call.1} parent=1 // pred_fallthru
      _
    // Predicated region
    $region14: #{tpu_custom_call.1} parent=1 // pred_check
      _
    $region15: #{tpu_custom_call.1} parent=1 // pred_check_branch
      %34 = sbr.rel (0) target = $region17
    $region16: #{tpu_custom_call.1} parent=1 // pred_region
      %35 = dma.done [#allocation6], 128
    $region17: #{tpu_custom_call.1} parent=1 // pred_fallthru
      _
    %p36 = scmp.eq.s32.totalorder 0, 0
    // Predicated region
    $region18: #{tpu_custom_call.1} parent=1 // pred_check
      %p37 = pneg %p36
    $region19: #{tpu_custom_call.1} parent=1 // pred_check_branch
      %39 = sbr.rel (%p37) target = $region21
    $region20: #{tpu_custom_call.1} parent=1 // pred_region
      %vm40 = vcmask 0
      %41 = vst.msk [vmem:[#allocation7] sm:$0x1] %vm40, 0.0
    $region21: #{tpu_custom_call.1} parent=1 // pred_fallthru
      _
    %v42 = vld [vmem:[#allocation2] sm:$0xff]
    %v43 = vld [vmem:[#allocation5] sm:$0xff]
    %v44 = vlog2.pop %v42
    %v45 = vmul.f32 %v44, 0.6931472
    %v46 = vmax.f32 %v45, -100.0
    %v47 = vsub.f32 1.0, %v42
    %v48 = vlog2.pop %v47
    %v49 = vmul.f32 %v48, 0.6931472
    %v50 = vmax.f32 %v49, -100.0
    %v51 = vmul.f32 %v43, %v46
    %v52 = vsub.f32 1.0, %v43
    %v53 = vmul.f32 %v52, %v50
    %v54 = vadd.f32 %v51, %v53
    %v55 = vsub.f32 0.0, %v54
    %v56 = vlaneseq
    %v57 = vshrl.u32 %v56, 7
    %v58 = vlaneseq
    %v59 = vand.u32 %v58, 127
    %s60 = smul.u32 0, 8
    %v61 = vstv %s60
    %v62 = vadd.s32 %v61, %v57
    %v63 = vmul.u32 %v62, 128
    %v64 = vadd.s32 %v63, %v59
    %vm65 = vcmp.lt.s32.totalorder %v64, 512
    %v66 = vsel %vm65, %v55, 0.0
    %v67 = vld [vmem:[#allocation7] sm:$0x1]
    %68 = vadd.xlane.f32.xlu0 %v66
    %v69 = vpop.xlane.xlu0 %68
    %v70 = vrot.slane %v69, 4
    %v71 = vadd.f32 %v69, %v70
    %v72 = vrot.slane %v71, 2
    %v73 = vadd.f32 %v71, %v72
    %v74 = vrot.slane %v73, 1
    %v75 = vadd.f32 %v73, %v74
    %s76 = vtos %v75
    %v77 = vstv %s76
    %v78 = vadd.f32 %v67, %v77
    %vm79 = vcmask 0
    %80 = vst.msk [vmem:[#allocation7] sm:$0x1] %vm79, %v78
    // Predicated region
    $region22: #{tpu_custom_call.1} parent=1 // pred_check
      %p81 = pneg %p36
    $region23: #{tpu_custom_call.1} parent=1 // pred_check_branch
      %83 = sbr.rel (%p81) target = $region25
    $region24: #{tpu_custom_call.1} parent=1 // pred_region
      %v84 = vld [vmem:[#allocation7] sm:$0x1]
      %v85 = vmul.f32 %v84, 0.001953125
      %86 = vst.msk [vmem:[#allocation7] sm:$0x1] %vm79, %v85
    $region25: #{tpu_custom_call.1} parent=1 // pred_fallthru
      _
    // Predicated region
    $region26: #{tpu_custom_call.1} parent=1 // pred_check
      _
    $region27: #{tpu_custom_call.1} parent=1 // pred_check_branch
      %88 = sbr.rel (0) target = $region29
    $region28: #{tpu_custom_call.1} parent=1 // pred_region
      %s90 = ssub.s32 16, 16
      %91 = vsyncadd [#allocation4], %s90
      %s93 = sshll.u32 [#allocation7], 4
      %s94 = int_to_ptr.vmem [resolvable:$true] %s93
      %96 = dma.vmem_to_hbm [thread:$0]  %s94, 16, %s2, [#allocation4]
    $region29: #{tpu_custom_call.1} parent=1 // pred_fallthru
      _
    // Predicated region
    $region30: #{tpu_custom_call.1} parent=1 // pred_check
      _
    $region31: #{tpu_custom_call.1} parent=1 // pred_check_branch
      %98 = sbr.rel (0) target = $region33
    $region32: #{tpu_custom_call.1} parent=1 // pred_region
      %99 = dma.done [#allocation4], 16
    $region33: #{tpu_custom_call.1} parent=1 // pred_fallthru
      _
    %100 = vsyncpa [#allocation3], 1
    %101 = vsyncpa [#allocation6], 1
    %102 = vsyncpa [#allocation4], 1

</llo_original>
